<compile_context>
chip_gen: v6e
topology: v6e:2x2x1
jax: 0.10.0
libtpu: 0.0.40
codegen_flags: <defaults>
</compile_context>

<pallas_src>
import functools

import jax
import jax.numpy as jnp
from jax.experimental import pallas as pl
from jax.experimental.pallas import tpu as pltpu


def _round_up(x, m):
    return (x + m - 1) // m * m


def _fcbl_kernel(cls_fg_ref, cls_bg_ref, margin_ref, label_ref,   # inputs
                 loss_ref, m_ref, i_ref,                          # outputs
                 loss_acc,                                        # scratch
                 *, num_classes, loss_weight, inv_n):
    pid = pl.program_id(0)

    @pl.when(pid == 0)
    def _init():
        loss_acc[0, 0] = jnp.float32(0.0)
        m_ref[...] = jnp.zeros_like(m_ref)
        i_ref[...] = jnp.zeros_like(i_ref)

    x_fg = cls_fg_ref[...]        # (TN, C_pad) f32; padded rows/lanes = -1e9
    x_bg = cls_bg_ref[...]        # (TN, 1)     f32; padded rows = -1e9
    margin = margin_ref[...]      # (TN, C_pad) f32; 0 for bg rows / padding
    lbl = label_ref[...]          # (TN, 1)     i32; padded rows = -1

    tn, c_pad = x_fg.shape
    col = jax.lax.broadcasted_iota(jnp.int32, (tn, c_pad), 1)
    pos = (lbl >= 0) & (lbl < num_classes)                   # (TN, 1)
    onehot_fg = jnp.where((lbl == col) & pos, 1.0, 0.0)      # (TN, C_pad) f32
    target_bg = (lbl == num_classes).astype(jnp.float32)     # (TN, 1)

    def bce_logits(z, t):
        # Numerically stable BCE-with-logits; exactly 0 for (z=-1e9, t=0),
        # i.e. padded rows / padded lanes contribute nothing.
        return jnp.maximum(z, 0.0) - z * t + jnp.log(1.0 + jnp.exp(-jnp.abs(z)))

    z_fg = x_fg + margin
    tile_loss = (jnp.sum(bce_logits(z_fg, onehot_fg)) +
                 jnp.sum(bce_logits(x_bg, target_bg)))
    loss_acc[0, 0] += tile_loss

    # update_cm() contributions: row softmax over fg logits (padded lanes
    # underflow to exactly 0; padded/background rows have a zero one-hot row,
    # so they drop out of the matmul below).
    s = x_fg - jnp.max(x_fg, axis=-1, keepdims=True)
    e = jnp.exp(s)
    sm = e * pl.reciprocal(jnp.sum(e, axis=-1, keepdims=True), approx=True)

    # bf16 MXU operands (cast before the transpose -> cheaper XLU traffic),
    # f32 accumulation; the one-hot operand is exact in bf16.
    onehot_bf = onehot_fg.astype(jnp.bfloat16)
    m_ref[...] += jnp.dot(onehot_bf.T, sm.astype(jnp.bfloat16),
                          preferred_element_type=jnp.float32)
    i_ref[...] += jnp.sum(onehot_fg, axis=0, keepdims=True)

    @pl.when(pid == pl.num_programs(0) - 1)
    def _finalize():
        loss_ref[0, 0] = loss_acc[0, 0] * (loss_weight * inv_n)


def fcbl_forward(cls_score, label, cm_numerator, num_gt, *,
                 num_classes, alpha=1.0, loss_weight=1.0, tile_n=256):
    """FCBL forward (use_sigmoid=True, reweight=False, reduction='mean').

    Returns (loss, new_cm_numerator, new_num_gt); the stateful update_cm()
    buffer mutation is returned functionally.
    tile_n: rows per grid step.  256 is safe on v5e/v6e/v7x at C~1280; v5e/v6e
    (128 MiB VMEM) can use larger tiles.
    """
    n_i, n_c = cls_score.shape
    assert n_c == num_classes + 1

    cls_score = cls_score.astype(jnp.float32)
    label = label.astype(jnp.int32)
    num_gt_f = num_gt.astype(jnp.float32)
    cm_num_f = cm_numerator.astype(jnp.float32)

    # ---- hoisted glue (runs once per call) ----------------------------------
    # get_cm() + pairwise log-margin table diff[y, j] = alpha*(log cm[y,j] -
    # log cm[j,y]).  Keeps the C^2 logs and the CxC transpose out of the kernel.
    cm = cm_num_f / jnp.maximum(num_gt_f, 1.0)[:, None]
    logcm = jnp.log(jnp.maximum(cm, 0.001))
    diff = (logcm - logcm.T) * alpha                          # (C, C)

    # Per-row margin via an XLA row gather (O(N*C)); replaces an O(N*C^2)
    # one-hot @ diff matmul inside the kernel.
    pos = label < num_classes
    safe_lbl = jnp.where(pos, label, 0)
    margin_fg = jnp.where(pos[:, None], diff[safe_lbl, :], 0.0)   # (N, C)

    # ---- lane / sublane alignment -------------------------------------------
    # Split fg / bg columns (no slice at the non-128-aligned column C), pad
    # C -> multiple of 128 lanes and N -> multiple of the row tile.  Padded
    # logits = -1e9 and padded labels = -1 => zero contribution everywhere.
    c_pad = _round_up(num_classes, 128)
    tn = min(tile_n, _round_up(n_i, 16))
    n_pad = _round_up(n_i, tn)
    grid = (n_pad // tn,)

    neg = -1e9
    cls_fg = jnp.pad(cls_score[:, :num_classes],
                     ((0, n_pad - n_i), (0, c_pad - num_classes)),
                     constant_values=neg)
    cls_bg = jnp.pad(cls_score[:, num_classes:],
                     ((0, n_pad - n_i), (0, 0)), constant_values=neg)
    margin_p = jnp.pad(margin_fg,
                       ((0, n_pad - n_i), (0, c_pad - num_classes)))
    label_p = jnp.pad(label[:, None], ((0, n_pad - n_i), (0, 0)),
                      constant_values=-1)

    # VMEM budget: double-buffered row tiles + resident M accumulator +
    # in-kernel temporaries; capped below v7x's 64 MiB physical VMEM.
    vmem_est = (4 * tn * c_pad * 4       # 2x double-buffered (TN, C_pad) inputs
                + c_pad * c_pad * 4      # resident M accumulator
                + 12 * tn * c_pad * 4)   # f32/bf16 temporaries
    vmem_limit = int(min(max(int(vmem_est * 1.5), 8 << 20), 56 << 20))

    kernel = functools.partial(_fcbl_kernel,
                               num_classes=int(num_classes),
                               loss_weight=float(loss_weight),
                               inv_n=1.0 / float(n_i))

    loss, m_delta_p, i_delta_p = pl.pallas_call(
        kernel,
        out_shape=(
            jax.ShapeDtypeStruct((1, 1), jnp.float32),
            jax.ShapeDtypeStruct((c_pad, c_pad), jnp.float32),
            jax.ShapeDtypeStruct((1, c_pad), jnp.float32),
        ),
        grid_spec=pltpu.PrefetchScalarGridSpec(
            num_scalar_prefetch=0,
            grid=grid,
            in_specs=[
                pl.BlockSpec((tn, c_pad), lambda i: (i, 0)),   # cls_fg
                pl.BlockSpec((tn, 1), lambda i: (i, 0)),       # cls_bg
                pl.BlockSpec((tn, c_pad), lambda i: (i, 0)),   # margin
                pl.BlockSpec((tn, 1), lambda i: (i, 0)),       # label
            ],
            out_specs=(
                pl.BlockSpec(memory_space=pltpu.MemorySpace.SMEM),   # loss
                pl.BlockSpec((c_pad, c_pad), lambda i: (0, 0)),      # M (resident)
                pl.BlockSpec((1, c_pad), lambda i: (0, 0)),          # I (resident)
            ),
            scratch_shapes=[pltpu.SMEM((1, 1), jnp.float32)],
        ),
        compiler_params=pltpu.CompilerParams(
            dimension_semantics=("arbitrary",),     # N axis is a reduction
            vmem_limit_bytes=vmem_limit),
    )(cls_fg, cls_bg, margin_p, label_p)

    # Functional equivalent of `if pos_inds.sum() > 0: update_cm(...)` — the
    # deltas are exactly zero when there are no positive rows.
    m_delta = m_delta_p[:num_classes, :num_classes]
    i_delta = i_delta_p[0, :num_classes]
    return loss[0, 0], cm_numerator + m_delta, num_gt + i_delta


def fcbl_reference(cls_score, label, cm_numerator, num_gt, *,
                   num_classes, alpha=1.0, loss_weight=1.0):
    """Pure-JAX reference mirroring the PyTorch forward (default branches)."""
    n_i, n_c = cls_score.shape
    cm = cm_numerator / jnp.maximum(num_gt, 1.0)[:, None]
    pos = label < num_classes
    target = jax.nn.one_hot(label, n_c, dtype=jnp.float32)

    safe_label = jnp.where(pos, label, 0)
    numerator = jnp.maximum(cm[safe_label, :], 0.001)            # (N, C)
    denominator = jnp.maximum(cm[:, safe_label].T, 0.001)        # (N, C)
    margin_fg = jnp.where(pos[:, None],
                          jnp.log(numerator / denominator) * alpha, 0.0)
    margin = jnp.concatenate([margin_fg, jnp.zeros((n_i, 1))], axis=1)

    z = cls_score.astype(jnp.float32) + margin
    bce = jnp.maximum(z, 0.0) - z * target + jnp.log(1.0 + jnp.exp(-jnp.abs(z)))
    loss = loss_weight * jnp.sum(bce) / n_i

    sm = jax.nn.softmax(cls_score[:, :num_classes].astype(jnp.float32), axis=1)
    sm = jnp.where(pos[:, None], sm, 0.0)
    m_delta = target[:, :num_classes].T @ sm
    i_delta = jnp.sum(target[:, :num_classes] * pos[:, None], axis=0)
    return loss, cm_numerator + m_delta, num_gt + i_delta


if __name__ == "__main__":
    NUM_CLASSES = 16       # small stand-in for the module's default 1230
    N = 40                 # number of rows (proposals); not a tile multiple
    ALPHA = 1.0
    LOSS_WEIGHT = 1.0

    key = jax.random.PRNGKey(0)
    k1, k2, k3, k4 = jax.random.split(key, 4)

    cls_score = jax.random.normal(k1, (N, NUM_CLASSES + 1), dtype=jnp.float32)
    label = jax.random.randint(k2, (N,), 0, NUM_CLASSES + 1, dtype=jnp.int32)
    label = label.at[0].set(3)             # guarantee >=1 foreground row
    label = label.at[1].set(NUM_CLASSES)   # guarantee >=1 background row
    # Deterministic non-trivial buffer state (module __init__ registers zeros,
    # which would give a degenerate all-zero margin; use synthetic state here).
    cm_numerator = jax.random.uniform(k3, (NUM_CLASSES, NUM_CLASSES),
                                      dtype=jnp.float32, minval=0.0, maxval=5.0)
    num_gt = jax.random.uniform(k4, (NUM_CLASSES,), dtype=jnp.float32,
                                minval=0.0, maxval=10.0)

    # Small row tile so the test exercises the N grid, accumulation and both
    # row and lane padding paths.
    loss, new_cm, new_gt = fcbl_forward(
        cls_score, label, cm_numerator, num_gt,
        num_classes=NUM_CLASSES, alpha=ALPHA, loss_weight=LOSS_WEIGHT,
        tile_n=16)
    jax.block_until_ready((loss, new_cm, new_gt))

    ref_loss, ref_cm, ref_gt = fcbl_reference(
        cls_score, label, cm_numerator, num_gt,
        num_classes=NUM_CLASSES, alpha=ALPHA, loss_weight=LOSS_WEIGHT)

    assert jnp.allclose(loss, ref_loss, rtol=1e-4, atol=1e-4), (loss, ref_loss)
    # bf16 MXU operands + approx-reciprocal softmax slightly perturb the
    # confusion-matrix statistics (~3 significant digits) -> looser tolerance.
    assert jnp.allclose(new_cm, ref_cm, rtol=2e-2, atol=2e-2)
    assert jnp.allclose(new_gt, ref_gt, rtol=1e-4, atol=1e-4)

    print("KERNEL_OK")
</pallas_src>

<mosaic_0001>
module attributes {stable_mosaic.version = 11 : i64} {
  func.func @_fcbl_kernel(%arg0: i32, %arg1: memref<16x128xf32, #tpu.memory_space<vmem>>, %arg2: memref<16x1xf32, #tpu.memory_space<vmem>>, %arg3: memref<16x128xf32, #tpu.memory_space<vmem>>, %arg4: memref<16x1xi32, #tpu.memory_space<vmem>>, %arg5: memref<1x1xf32, #tpu.memory_space<smem>>, %arg6: memref<128x128xf32, #tpu.memory_space<vmem>>, %arg7: memref<1x128xf32, #tpu.memory_space<vmem>>, %arg8: memref<1x1xf32, #tpu.memory_space<smem>>) attributes {dimension_semantics = [#tpu.dimension_semantics<arbitrary>], iteration_bounds = array<i64: 3>, scalar_prefetch = 0 : i64, scratch_operands = 1 : i64, tpu.core_type = #tpu.core_type<tc>, window_params = [{transform_indices = @transform_0, window_bounds = array<i64: 16, 128>}, {transform_indices = @transform_1, window_bounds = array<i64: 16, 1>}, {transform_indices = @transform_2, window_bounds = array<i64: 16, 128>}, {transform_indices = @transform_3, window_bounds = array<i64: 16, 1>}, {transform_indices = @transform_4, window_bounds = array<i64: 1, 1>}, {pipeline_mode = #tpu.pipeline_mode<synchronous>, transform_indices = @transform_5, window_bounds = array<i64: 128, 128>}, {pipeline_mode = #tpu.pipeline_mode<synchronous>, transform_indices = @transform_6, window_bounds = array<i64: 1, 128>}]} {
    %c0_i32 = arith.constant 0 : i32
    %0 = arith.cmpi eq, %arg0, %c0_i32 : i32
    %1 = arith.extui %0 : i1 to i32
    %c0_i32_0 = arith.constant 0 : i32
    %2 = arith.cmpi ne, %1, %c0_i32_0 : i32
    scf.if %2 {
      %cst_36 = arith.constant 0.000000e+00 : f32
      %c0_37 = arith.constant 0 : index
      %c0_38 = arith.constant 0 : index
      %86 = memref.load %arg8[%c0_37, %c0_38] : memref<1x1xf32, #tpu.memory_space<smem>>
      memref.store %cst_36, %arg8[%c0_37, %c0_38] : memref<1x1xf32, #tpu.memory_space<smem>>
      %cst_39 = arith.constant 0.000000e+00 : f32
      %87 = vector.broadcast %cst_39 : f32 to vector<128x128xf32>
      %c0_40 = arith.constant 0 : index
      %c0_41 = arith.constant 0 : index
      %88 = vector.load %arg6[%c0_40, %c0_41] : memref<128x128xf32, #tpu.memory_space<vmem>>, vector<128x128xf32>
      tpu.vector_store %arg6[%c0_40, %c0_41], %87 {strides = array<i32>} : memref<128x128xf32, #tpu.memory_space<vmem>>, vector<128x128xf32>,
      %cst_42 = arith.constant 0.000000e+00 : f32
      %89 = vector.broadcast %cst_42 : f32 to vector<1x128xf32>
      %c0_43 = arith.constant 0 : index
      %c0_44 = arith.constant 0 : index
      %90 = vector.load %arg7[%c0_43, %c0_44] : memref<1x128xf32, #tpu.memory_space<vmem>>, vector<1x128xf32>
      tpu.vector_store %arg7[%c0_43, %c0_44], %89 {strides = array<i32>} : memref<1x128xf32, #tpu.memory_space<vmem>>, vector<1x128xf32>,
    } else {
    }
    %c0 = arith.constant 0 : index
    %c0_1 = arith.constant 0 : index
    %3 = vector.load %arg1[%c0, %c0_1] : memref<16x128xf32, #tpu.memory_space<vmem>>, vector<16x128xf32>
    %c0_2 = arith.constant 0 : index
    %c0_3 = arith.constant 0 : index
    %4 = vector.load %arg2[%c0_2, %c0_3] : memref<16x1xf32, #tpu.memory_space<vmem>>, vector<16x1xf32>
    %c0_4 = arith.constant 0 : index
    %c0_5 = arith.constant 0 : index
    %5 = vector.load %arg3[%c0_4, %c0_5] : memref<16x128xf32, #tpu.memory_space<vmem>>, vector<16x128xf32>
    %c0_6 = arith.constant 0 : index
    %c0_7 = arith.constant 0 : index
    %6 = vector.load %arg4[%c0_6, %c0_7] : memref<16x1xi32, #tpu.memory_space<vmem>>, vector<16x1xi32>
    %7 = tpu.iota {dimensions = array<i32: 1>} : vector<16x128xi32>
    %c0_i32_8 = arith.constant 0 : i32
    %8 = vector.broadcast %c0_i32_8 : i32 to vector<16x1xi32>
    %9 = arith.cmpi sge, %6, %8 : vector<16x1xi32>
    %c16_i32 = arith.constant 16 : i32
    %10 = vector.broadcast %c16_i32 : i32 to vector<16x1xi32>
    %11 = arith.cmpi slt, %6, %10 : vector<16x1xi32>
    %12 = arith.andi %9, %11 : vector<16x1xi1>
    %13 = vector.broadcast %6 : vector<16x1xi32> to vector<16x128xi32>
    %14 = arith.cmpi eq, %13, %7 : vector<16x128xi32>
    %15 = vector.broadcast %12 : vector<16x1xi1> to vector<16x128xi1>
    %16 = arith.andi %14, %15 : vector<16x128xi1>
    %cst = arith.constant 1.000000e+00 : f32
    %cst_9 = arith.constant 0.000000e+00 : f32
    %17 = vector.broadcast %cst : f32 to vector<16x128xf32>
    %18 = vector.broadcast %cst_9 : f32 to vector<16x128xf32>
    %19 = arith.select %16, %17, %18 : vector<16x128xi1>, vector<16x128xf32>
    %c16_i32_10 = arith.constant 16 : i32
    %20 = vector.broadcast %c16_i32_10 : i32 to vector<16x1xi32>
    %21 = arith.cmpi eq, %6, %20 : vector<16x1xi32>
    %22 = arith.extui %21 : vector<16x1xi1> to vector<16x1xi32>
    %23 = arith.sitofp %22 : vector<16x1xi32> to vector<16x1xf32>
    %24 = arith.addf %3, %5 : vector<16x128xf32>
    %cst_11 = arith.constant 0.000000e+00 : f32
    %25 = vector.broadcast %cst_11 : f32 to vector<16x128xf32>
    %26 = arith.maximumf %24, %25 : vector<16x128xf32>
    %27 = arith.mulf %24, %19 : vector<16x128xf32>
    %28 = arith.subf %26, %27 : vector<16x128xf32>
    %29 = math.absf %24 : vector<16x128xf32>
    %cst_12 = arith.constant 0.000000e+00 : f32
    %30 = vector.broadcast %cst_12 : f32 to vector<16x128xf32>
    %31 = arith.subf %30, %29 : vector<16x128xf32>
    %32 = math.exp %31 : vector<16x128xf32>
    %cst_13 = arith.constant 1.000000e+00 : f32
    %33 = vector.broadcast %cst_13 : f32 to vector<16x128xf32>
    %34 = arith.addf %33, %32 : vector<16x128xf32>
    %35 = math.log %34 : vector<16x128xf32>
    %36 = arith.addf %28, %35 : vector<16x128xf32>
    %37 = vector.shape_cast %36 : vector<16x128xf32> to vector<1x16x128xf32>
    %cst_14 = arith.constant dense<0.000000e+00> : vector<1xf32>
    %38 = vector.multi_reduction <add>, %37, %cst_14 [1, 2] : vector<1x16x128xf32> to vector<1xf32>
    %39 = vector.shape_cast %38 : vector<1xf32> to vector<1x1x1xf32>
    %40 = vector.extract %39[0, 0, 0] : f32 from vector<1x1x1xf32>
    %cst_15 = arith.constant 0.000000e+00 : f32
    %41 = vector.broadcast %cst_15 : f32 to vector<16x1xf32>
    %42 = arith.maximumf %4, %41 : vector<16x1xf32>
    %43 = arith.mulf %4, %23 : vector<16x1xf32>
    %44 = arith.subf %42, %43 : vector<16x1xf32>
    %45 = math.absf %4 : vector<16x1xf32>
    %cst_16 = arith.constant 0.000000e+00 : f32
    %46 = vector.broadcast %cst_16 : f32 to vector<16x1xf32>
    %47 = arith.subf %46, %45 : vector<16x1xf32>
    %48 = math.exp %47 : vector<16x1xf32>
    %cst_17 = arith.constant 1.000000e+00 : f32
    %49 = vector.broadcast %cst_17 : f32 to vector<16x1xf32>
    %50 = arith.addf %49, %48 : vector<16x1xf32>
    %51 = math.log %50 : vector<16x1xf32>
    %52 = arith.addf %44, %51 : vector<16x1xf32>
    %53 = vector.shape_cast %52 : vector<16x1xf32> to vector<1x16x1xf32>
    %cst_18 = arith.constant dense<0.000000e+00> : vector<1xf32>
    %54 = vector.multi_reduction <add>, %53, %cst_18 [1, 2] : vector<1x16x1xf32> to vector<1xf32>
    %55 = vector.shape_cast %54 : vector<1xf32> to vector<1x1x1xf32>
    %56 = vector.extract %55[0, 0, 0] : f32 from vector<1x1x1xf32>
    %57 = arith.addf %40, %56 : f32
    %c0_19 = arith.constant 0 : index
    %c0_20 = arith.constant 0 : index
    %58 = memref.load %arg8[%c0_19, %c0_20] : memref<1x1xf32, #tpu.memory_space<smem>>
    %59 = arith.addf %58, %57 : f32
    %c0_21 = arith.constant 0 : index
    %c0_22 = arith.constant 0 : index
    %60 = memref.load %arg8[%c0_21, %c0_22] : memref<1x1xf32, #tpu.memory_space<smem>>
    memref.store %59, %arg8[%c0_21, %c0_22] : memref<1x1xf32, #tpu.memory_space<smem>>
    %cst_23 = arith.constant dense<0xFF800000> : vector<16xf32>
    %61 = vector.multi_reduction <maximumf>, %3, %cst_23 [1] : vector<16x128xf32> to vector<16xf32>
    %62 = vector.shape_cast %61 : vector<16xf32> to vector<16x1xf32>
    %63 = vector.broadcast %62 : vector<16x1xf32> to vector<16x128xf32>
    %64 = arith.subf %3, %63 : vector<16x128xf32>
    %65 = math.exp %64 : vector<16x128xf32>
    %cst_24 = arith.constant dense<0.000000e+00> : vector<16xf32>
    %66 = vector.multi_reduction <add>, %65, %cst_24 [1] : vector<16x128xf32> to vector<16xf32>
    %67 = vector.shape_cast %66 : vector<16xf32> to vector<16x1xf32>
    %68 = tpu.reciprocal %67 {approx = true} : vector<16x1xf32> -> vector<16x1xf32>
    %69 = vector.broadcast %68 : vector<16x1xf32> to vector<16x128xf32>
    %70 = arith.mulf %65, %69 : vector<16x128xf32>
    %71 = arith.truncf %19 : vector<16x128xf32> to vector<16x128xbf16>
    %c0_25 = arith.constant 0 : index
    %c0_26 = arith.constant 0 : index
    %72 = vector.load %arg6[%c0_25, %c0_26] : memref<128x128xf32, #tpu.memory_space<vmem>>, vector<128x128xf32>
    %73 = tpu.transpose %71, [1, 0] : vector<16x128xbf16> -> vector<128x16xbf16>
    %74 = arith.truncf %70 : vector<16x128xf32> to vector<16x128xbf16>
    %cst_27 = arith.constant dense<0.000000e+00> : vector<128x128xf32>
    %75 = tpu.matmul %73, %74, %cst_27 {dimension_numbers = #tpu.dot_dimension_numbers<[1], [0], [0], [1], [0, 0, 1, 1], [], []>} : vector<128x16xbf16>, vector<16x128xbf16>, vector<128x128xf32> -> vector<128x128xf32>
    %76 = arith.addf %72, %75 : vector<128x128xf32>
    %c0_28 = arith.constant 0 : index
    %c0_29 = arith.constant 0 : index
    %77 = vector.load %arg6[%c0_28, %c0_29] : memref<128x128xf32, #tpu.memory_space<vmem>>, vector<128x128xf32>
    tpu.vector_store %arg6[%c0_28, %c0_29], %76 {strides = array<i32>} : memref<128x128xf32, #tpu.memory_space<vmem>>, vector<128x128xf32>,
    %c0_30 = arith.constant 0 : index
    %c0_31 = arith.constant 0 : index
    %78 = vector.load %arg7[%c0_30, %c0_31] : memref<1x128xf32, #tpu.memory_space<vmem>>, vector<1x128xf32>
    %cst_32 = arith.constant dense<0.000000e+00> : vector<128xf32>
    %79 = vector.multi_reduction <add>, %19, %cst_32 [0] : vector<16x128xf32> to vector<128xf32>
    %80 = vector.shape_cast %79 : vector<128xf32> to vector<1x128xf32>
    %81 = arith.addf %78, %80 : vector<1x128xf32>
    %c0_33 = arith.constant 0 : index
    %c0_34 = arith.constant 0 : index
    %82 = vector.load %arg7[%c0_33, %c0_34] : memref<1x128xf32, #tpu.memory_space<vmem>>, vector<1x128xf32>
    tpu.vector_store %arg7[%c0_33, %c0_34], %81 {strides = array<i32>} : memref<1x128xf32, #tpu.memory_space<vmem>>, vector<1x128xf32>,
    %c2_i32 = arith.constant 2 : i32
    %83 = arith.cmpi eq, %arg0, %c2_i32 : i32
    %84 = arith.extui %83 : i1 to i32
    %c0_i32_35 = arith.constant 0 : i32
    %85 = arith.cmpi ne, %84, %c0_i32_35 : i32
    scf.if %85 {
      %c0_36 = arith.constant 0 : index
      %c0_37 = arith.constant 0 : index
      %86 = memref.load %arg8[%c0_36, %c0_37] : memref<1x1xf32, #tpu.memory_space<smem>>
      %cst_38 = arith.constant 2.500000e-02 : f32
      %87 = arith.mulf %86, %cst_38 : f32
      %c0_39 = arith.constant 0 : index
      %c0_40 = arith.constant 0 : index
      %88 = memref.load %arg5[%c0_39, %c0_40] : memref<1x1xf32, #tpu.memory_space<smem>>
      memref.store %87, %arg5[%c0_39, %c0_40] : memref<1x1xf32, #tpu.memory_space<smem>>
    } else {
    }
    return
  }
  func.func @transform_0(%arg0: i32) -> (i32, i32) {
    %c0_i32 = arith.constant 0 : i32
    %c0_i32_0 = arith.constant 0 : i32
    return %arg0, %c0_i32 : i32, i32
  }
  func.func @transform_1(%arg0: i32) -> (i32, i32) {
    %c0_i32 = arith.constant 0 : i32
    %c0_i32_0 = arith.constant 0 : i32
    return %arg0, %c0_i32 : i32, i32
  }
  func.func @transform_2(%arg0: i32) -> (i32, i32) {
    %c0_i32 = arith.constant 0 : i32
    %c0_i32_0 = arith.constant 0 : i32
    return %arg0, %c0_i32 : i32, i32
  }
  func.func @transform_3(%arg0: i32) -> (i32, i32) {
    %c0_i32 = arith.constant 0 : i32
    %c0_i32_0 = arith.constant 0 : i32
    return %arg0, %c0_i32 : i32, i32
  }
  func.func @transform_4(%arg0: i32) -> (i32, i32) {
    %c0_i32 = arith.constant 0 : i32
    %c0_i32_0 = arith.constant 0 : i32
    %c0_i32_1 = arith.constant 0 : i32
    return %c0_i32, %c0_i32_0 : i32, i32
  }
  func.func @transform_5(%arg0: i32) -> (i32, i32) {
    %c0_i32 = arith.constant 0 : i32
    %c0_i32_0 = arith.constant 0 : i32
    %c0_i32_1 = arith.constant 0 : i32
    return %c0_i32, %c0_i32_0 : i32, i32
  }
  func.func @transform_6(%arg0: i32) -> (i32, i32) {
    %c0_i32 = arith.constant 0 : i32
    %c0_i32_0 = arith.constant 0 : i32
    %c0_i32_1 = arith.constant 0 : i32
    return %c0_i32, %c0_i32_0 : i32, i32
  }
}

</mosaic_0001>

<llo_original>
// kernel: tpu_custom_call.1
$region0: #{tpu_custom_call.1}
  #allocation0 [shape = 'u32[]', space=smem, size = 0x4, offset = 0x4, fixed_abs, tag = 'smem constant byte address 0x4 - core index']
  #allocation1 [shape = 'u32[144,128]{1,0:T(1,128)}', space=vmem, size = 0x12000, scoped, tag = 'internal scratch']
  #allocation2 [shape = 'f32[1,1]{1,0:T(1,128)}', space=smem, size = 0x200, scoped, tag = 'scratch operand']
  %s0 = inlined_call_operand.vmem [shape: f32[48,128], index: 0, kind: input, shape index: {}]
  %s1 = inlined_call_operand.vmem [shape: f32[48,1], index: 1, kind: input, shape index: {}]
  %s2 = inlined_call_operand.vmem [shape: f32[48,128], index: 2, kind: input, shape index: {}]
  %s3 = inlined_call_operand.vmem [shape: s32[48,1], index: 3, kind: input, shape index: {}]
  %s4 = inlined_call_operand.hbm [shape: f32[1,1], index: 4, kind: output, shape index: {0}]
  %s5 = inlined_call_operand.hbm [shape: f32[128,128], index: 5, kind: output, shape index: {1}]
  %s6 = inlined_call_operand.hbm [shape: f32[1,128], index: 6, kind: output, shape index: {2}]
  %7 = xla_tuple %s4, %s5, %s6
  %s8 = sld [smem:[#allocation0]]
  $region73: #{tpu_custom_call.1} parent=0
    _
  %s10 = ssub.s32 1, %s8
  %s11 = scalar_select 0, %s10, %s8
  $region1: #{tpu_custom_call.1} parent=0
    #allocation3 [shape = 'u8[512]{0}', space=smem, size = 0x200, scoped, tag = 'output window, operand 0, single buffered']
    #allocation4 [shape = 's32[2]{0}', space=sflag, size = 0x8, scoped, tag = 'scoped memory for tpu_custom_call.1']
    #allocation5 [shape = 's32[2]{0}', space=sflag, size = 0x8, scoped, tag = 'scoped memory for tpu_custom_call.1']
    #allocation6 [shape = 'u8[65536]{0}', space=vmem, size = 0x10000, scoped, tag = 'output window, operand 1, single buffered']
    #allocation7 [shape = 'u8[512]{0}', space=vmem, size = 0x400, scoped, tag = 'output window, operand 2, single buffered']
    #allocation8 [shape = 's32[1]{0}', space=sflag, size = 0x4, scoped, tag = 'scoped memory for tpu_custom_call.1']
    %12 = vsyncpa [#allocation5], 0
    %13 = vsyncpa [#allocation4], 0
    %14 = vsyncpa [#allocation8], 0
    loop: start=0, step=1, limit=5
    $region2: #{tpu_custom_call.1} parent=1 // loop_pre_header
      _
    $region3: #{tpu_custom_call.1} parent=1 // loop_header
      %s16 = sphi 0, %s20
      %p17 = scmp.ge.s32.totalorder %s16, 5
      %s26 = sphi 0, %s28
      %s29 = sphi 0, %s26
      %s30 = sphi 0, %s29
      %s46 = sphi 0, %s30
      %s52 = sphi 0, %s54
      %s55 = sphi 0, %s52
      %s56 = sphi 0, %s55
      %s72 = sphi 0, %s56
      %s78 = sphi 0, %s80
      %s81 = sphi 0, %s78
      %s82 = sphi 0, %s81
      %s98 = sphi 0, %s82
      %s104 = sphi 0, %s106
      %s107 = sphi 0, %s104
      %s108 = sphi 0, %s107
      %s124 = sphi 0, %s108
      %s128 = sphi 0, %s128
      %s130 = sphi 0, %s128
      %s131 = sphi 0, %s130
      %s145 = sphi 0, %s131
      %s149 = sphi 0, %s149
      %s151 = sphi 0, %s149
      %s152 = sphi 0, %s151
      %s166 = sphi 0, %s152
      %s170 = sphi 0, %s170
      %s172 = sphi 0, %s170
      %s173 = sphi 0, %s172
      %s187 = sphi 0, %s173
    $region4: #{tpu_custom_call.1} parent=1 // loop_header_branch
      %19 = sbr.rel (%p17) target = $region8
    $region5: #{tpu_custom_call.1} parent=1 // loop_body
      %s21 = ssub.s32 %s16, 1
      %s22 = ssub.s32 %s16, 2
      %s23 = sadd.s32 %s16, 1
      %s24 = ssub.s32 %s16, %s23
      %p25 = scmp.eq.s32.totalorder %s24, 0
      %s27 = sadd.s32 %s26, 1
      %s28 = scalar_select %p25, %s26, %s27
      %p31 = pneg %p25
      %p32 = scmp.eq.s32.totalorder %s16, 2
      %p33 = por %p31, %p32
      %p34 = scmp.ne.s32.totalorder %s26, %s29
      %p35 = scmp.eq.s32.totalorder %s16, 0
      %p36 = por %p34, %p35
      %p37 = scmp.ne.s32.totalorder %s26, %s29
      %p38 = scmp.eq.s32.totalorder %s21, 2
      %p39 = por %p37, %p38
      %p40 = scmp.ne.s32.totalorder %s29, %s30
      %p41 = scmp.eq.s32.totalorder %s21, 0
      %p42 = por %p40, %p41
      %p43 = scmp.ne.s32.totalorder %s29, %s30
      %p44 = scmp.eq.s32.totalorder %s22, 2
      %p45 = por %p43, %p44
      %p47 = scmp.ne.s32.totalorder %s30, %s46
      %p48 = scmp.eq.s32.totalorder %s22, 0
      %p49 = por %p47, %p48
      %s50 = ssub.s32 %s16, %s23
      %p51 = scmp.eq.s32.totalorder %s50, 0
      %s53 = sadd.s32 %s52, 1
      %s54 = scalar_select %p51, %s52, %s53
      %p57 = pneg %p51
      %p58 = scmp.eq.s32.totalorder %s16, 2
      %p59 = por %p57, %p58
      %p60 = scmp.ne.s32.totalorder %s52, %s55
      %p61 = scmp.eq.s32.totalorder %s16, 0
      %p62 = por %p60, %p61
      %p63 = scmp.ne.s32.totalorder %s52, %s55
      %p64 = scmp.eq.s32.totalorder %s21, 2
      %p65 = por %p63, %p64
      %p66 = scmp.ne.s32.totalorder %s55, %s56
      %p67 = scmp.eq.s32.totalorder %s21, 0
      %p68 = por %p66, %p67
      %p69 = scmp.ne.s32.totalorder %s55, %s56
      %p70 = scmp.eq.s32.totalorder %s22, 2
      %p71 = por %p69, %p70
      %p73 = scmp.ne.s32.totalorder %s56, %s72
      %p74 = scmp.eq.s32.totalorder %s22, 0
      %p75 = por %p73, %p74
      %s76 = ssub.s32 %s16, %s23
      %p77 = scmp.eq.s32.totalorder %s76, 0
      %s79 = sadd.s32 %s78, 1
      %s80 = scalar_select %p77, %s78, %s79
      %p83 = pneg %p77
      %p84 = scmp.eq.s32.totalorder %s16, 2
      %p85 = por %p83, %p84
      %p86 = scmp.ne.s32.totalorder %s78, %s81
      %p87 = scmp.eq.s32.totalorder %s16, 0
      %p88 = por %p86, %p87
      %p89 = scmp.ne.s32.totalorder %s78, %s81
      %p90 = scmp.eq.s32.totalorder %s21, 2
      %p91 = por %p89, %p90
      %p92 = scmp.ne.s32.totalorder %s81, %s82
      %p93 = scmp.eq.s32.totalorder %s21, 0
      %p94 = por %p92, %p93
      %p95 = scmp.ne.s32.totalorder %s81, %s82
      %p96 = scmp.eq.s32.totalorder %s22, 2
      %p97 = por %p95, %p96
      %p99 = scmp.ne.s32.totalorder %s82, %s98
      %p100 = scmp.eq.s32.totalorder %s22, 0
      %p101 = por %p99, %p100
      %s102 = ssub.s32 %s16, %s23
      %p103 = scmp.eq.s32.totalorder %s102, 0
      %s105 = sadd.s32 %s104, 1
      %s106 = scalar_select %p103, %s104, %s105
      %p109 = pneg %p103
      %p110 = scmp.eq.s32.totalorder %s16, 2
      %p111 = por %p109, %p110
      %p112 = scmp.ne.s32.totalorder %s104, %s107
      %p113 = scmp.eq.s32.totalorder %s16, 0
      %p114 = por %p112, %p113
      %p115 = scmp.ne.s32.totalorder %s104, %s107
      %p116 = scmp.eq.s32.totalorder %s21, 2
      %p117 = por %p115, %p116
      %p118 = scmp.ne.s32.totalorder %s107, %s108
      %p119 = scmp.eq.s32.totalorder %s21, 0
      %p120 = por %p118, %p119
      %p121 = scmp.ne.s32.totalorder %s107, %s108
      %p122 = scmp.eq.s32.totalorder %s22, 2
      %p123 = por %p121, %p122
      %p125 = scmp.ne.s32.totalorder %s108, %s124
      %p126 = scmp.eq.s32.totalorder %s22, 0
      %p127 = por %p125, %p126
      %s129 = sadd.s32 %s128, 1
      %p132 = scmp.eq.s32.totalorder %s16, 2
      %p133 = scmp.ne.s32.totalorder %s128, %s130
      %p134 = scmp.eq.s32.totalorder %s16, 0
      %p135 = por %p133, %p134
      %p136 = scmp.ne.s32.totalorder %s128, %s130
      %p137 = scmp.eq.s32.totalorder %s21, 2
      %p138 = por %p136, %p137
      %p139 = scmp.ne.s32.totalorder %s130, %s131
      %p140 = scmp.eq.s32.totalorder %s21, 0
      %p141 = por %p139, %p140
      %p142 = scmp.ne.s32.totalorder %s130, %s131
      %p143 = scmp.eq.s32.totalorder %s22, 2
      %p144 = por %p142, %p143
      %p146 = scmp.ne.s32.totalorder %s131, %s145
      %p147 = scmp.eq.s32.totalorder %s22, 0
      %p148 = por %p146, %p147
      %s150 = sadd.s32 %s149, 1
      %p153 = scmp.eq.s32.totalorder %s16, 2
      %p154 = scmp.ne.s32.totalorder %s149, %s151
      %p155 = scmp.eq.s32.totalorder %s16, 0
      %p156 = por %p154, %p155
      %p157 = scmp.ne.s32.totalorder %s149, %s151
      %p158 = scmp.eq.s32.totalorder %s21, 2
      %p159 = por %p157, %p158
      %p160 = scmp.ne.s32.totalorder %s151, %s152
      %p161 = scmp.eq.s32.totalorder %s21, 0
      %p162 = por %p160, %p161
      %p163 = scmp.ne.s32.totalorder %s151, %s152
      %p164 = scmp.eq.s32.totalorder %s22, 2
      %p165 = por %p163, %p164
      %p167 = scmp.ne.s32.totalorder %s152, %s166
      %p168 = scmp.eq.s32.totalorder %s22, 0
      %p169 = por %p167, %p168
      %s171 = sadd.s32 %s170, 1
      %p174 = scmp.eq.s32.totalorder %s16, 2
      %p175 = scmp.ne.s32.totalorder %s170, %s172
      %p176 = scmp.eq.s32.totalorder %s16, 0
      %p177 = por %p175, %p176
      %p178 = scmp.ne.s32.totalorder %s170, %s172
      %p179 = scmp.eq.s32.totalorder %s21, 2
      %p180 = por %p178, %p179
      %p181 = scmp.ne.s32.totalorder %s172, %s173
      %p182 = scmp.eq.s32.totalorder %s21, 0
      %p183 = por %p181, %p182
      %p184 = scmp.ne.s32.totalorder %s172, %s173
      %p185 = scmp.eq.s32.totalorder %s22, 2
      %p186 = por %p184, %p185
      %p188 = scmp.ne.s32.totalorder %s173, %s187
      %p189 = scmp.eq.s32.totalorder %s22, 0
      %p190 = por %p188, %p189
      %p191 = scmp.le.s32.totalorder 1, %s16
      %p192 = scmp.lt.s32.totalorder %s16, 4
      %p193 = pnand %p191, %p192
      %p194 = pneg %p193
      // Predicated region
      $region9: #{tpu_custom_call.1} parent=5 // pred_check
        _
      $region10: #{tpu_custom_call.1} parent=5 // pred_check_branch
        %196 = sbr.rel (%p193) target = $region12
      $region11: #{tpu_custom_call.1} parent=5 // pred_region
        %s197 = ssub.s32 %s16, 1
      $region12: #{tpu_custom_call.1} parent=5 // pred_fallthru
        _
      %p198 = scmp.lt.s32.totalorder %s16, 3
      // Predicated region
      $region13: #{tpu_custom_call.1} parent=5 // pred_check
        %p199 = pneg %p198
      $region14: #{tpu_custom_call.1} parent=5 // pred_check_branch
        %201 = sbr.rel (%p199) target = $region16
      $region15: #{tpu_custom_call.1} parent=5 // pred_region
        // Predicated region
        $region17: #{tpu_custom_call.1} parent=15 // pred_check
          %p202 = pneg %p36
        $region18: #{tpu_custom_call.1} parent=15 // pred_check_branch
          %204 = sbr.rel (%p202) target = $region20
        $region19: #{tpu_custom_call.1} parent=15 // pred_region
          %s205 = smul.u32 2, %s16
          %p206 = scmp.lt.s32.totalorder %s205, 5
          %s207 = scalar_select %p206, %s205, 5
          %s208 = smul.addr %s207, 8
          %s209 = scalar_lea.vmem %s0, %s208
          %s210 = smul.u32 2, %s16
        $region20: #{tpu_custom_call.1} parent=15 // pred_fallthru
          _
        // Predicated region
        $region21: #{tpu_custom_call.1} parent=15 // pred_check
          %p211 = pneg %p62
        $region22: #{tpu_custom_call.1} parent=15 // pred_check_branch
          %213 = sbr.rel (%p211) target = $region24
        $region23: #{tpu_custom_call.1} parent=15 // pred_region
          %s214 = smul.u32 2, %s16
          %p215 = scmp.lt.s32.totalorder %s214, 5
          %s216 = scalar_select %p215, %s214, 5
          %s217 = smul.addr %s216, 8
          %s218 = scalar_lea.vmem %s1, %s217
          %s219 = smul.u32 2, %s16
        $region24: #{tpu_custom_call.1} parent=15 // pred_fallthru
          _
        // Predicated region
        $region25: #{tpu_custom_call.1} parent=15 // pred_check
          %p220 = pneg %p88
        $region26: #{tpu_custom_call.1} parent=15 // pred_check_branch
          %222 = sbr.rel (%p220) target = $region28
        $region27: #{tpu_custom_call.1} parent=15 // pred_region
          %s223 = smul.u32 2, %s16
          %p224 = scmp.lt.s32.totalorder %s223, 5
          %s225 = scalar_select %p224, %s223, 5
          %s226 = smul.addr %s225, 8
          %s227 = scalar_lea.vmem %s2, %s226
          %s228 = smul.u32 2, %s16
        $region28: #{tpu_custom_call.1} parent=15 // pred_fallthru
          _
        // Predicated region
        $region29: #{tpu_custom_call.1} parent=15 // pred_check
          %p229 = pneg %p114
        $region30: #{tpu_custom_call.1} parent=15 // pred_check_branch
          %231 = sbr.rel (%p229) target = $region32
        $region31: #{tpu_custom_call.1} parent=15 // pred_region
          %s232 = smul.u32 2, %s16
          %p233 = scmp.lt.s32.totalorder %s232, 5
          %s234 = scalar_select %p233, %s232, 5
          %s235 = smul.addr %s234, 8
          %s236 = scalar_lea.vmem %s3, %s235
          %s237 = smul.u32 2, %s16
        $region32: #{tpu_custom_call.1} parent=15 // pred_fallthru
          _
      $region16: #{tpu_custom_call.1} parent=5 // pred_fallthru
        _
      %p238 = scmp.le.s32.totalorder 1, %s16
      %p239 = scmp.lt.s32.totalorder %s16, 4
      %p240 = pnand %p238, %p239
      %p241 = pneg %p240
      // Predicated region
      $region33: #{tpu_custom_call.1} parent=5 // pred_check
        _
      $region34: #{tpu_custom_call.1} parent=5 // pred_check_branch
        %243 = sbr.rel (%p240) target = $region36
      $region35: #{tpu_custom_call.1} parent=5 // pred_region
        %s244 = ssub.s32 %s16, 1
        %s245 = smul.u32 2, %s21
        %p246 = scmp.lt.s32.totalorder %s245, 5
        %s247 = scalar_select %p246, %s245, 5
        %s248 = smul.addr %s247, 8
        %s249 = scalar_lea.vmem %s0, %s248
        %p250 = pneg %p42
        %p251 = pneg %p39
        %s252 = smul.u32 2, %s21
        %p253 = scmp.lt.s32.totalorder %s252, 5
        %s254 = scalar_select %p253, %s252, 5
        %s255 = smul.addr %s254, 8
        %s256 = scalar_lea.vmem %s1, %s255
        %p257 = pneg %p68
        %p258 = pneg %p65
        %s259 = smul.u32 2, %s21
        %p260 = scmp.lt.s32.totalorder %s259, 5
        %s261 = scalar_select %p260, %s259, 5
        %s262 = smul.addr %s261, 8
        %s263 = scalar_lea.vmem %s2, %s262
        %p264 = pneg %p94
        %p265 = pneg %p91
        %s266 = smul.u32 2, %s21
        %p267 = scmp.lt.s32.totalorder %s266, 5
        %s268 = scalar_select %p267, %s266, 5
        %s269 = smul.addr %s268, 8
        %s270 = scalar_lea.vmem %s3, %s269
        %p271 = pneg %p120
        %p272 = pneg %p117
        %p273 = pneg %p141
        %p274 = pneg %p138
        %p275 = pneg %p162
        %p276 = pneg %p159
        %p277 = pneg %p183
        %p278 = pneg %p180
        %s279 = smul.u32 2, %s21
        %p280 = scmp.lt.s32.totalorder %s279, 5
        %s281 = scalar_select %p280, %s279, 5
        %s282 = smul.addr %s281, 8
        %s283 = scalar_lea.vmem %s0, %s282
        %s284 = smul.u32 2, %s21
        %s285 = smul.u32 2, %s21
        %p286 = scmp.lt.s32.totalorder %s285, 5
        %s287 = scalar_select %p286, %s285, 5
        %s288 = smul.addr %s287, 8
        %s289 = scalar_lea.vmem %s1, %s288
        %s290 = smul.u32 2, %s21
        %s291 = smul.u32 2, %s21
        %p292 = scmp.lt.s32.totalorder %s291, 5
        %s293 = scalar_select %p292, %s291, 5
        %s294 = smul.addr %s293, 8
        %s295 = scalar_lea.vmem %s2, %s294
        %s296 = smul.u32 2, %s21
        %s297 = smul.u32 2, %s21
        %p298 = scmp.lt.s32.totalorder %s297, 5
        %s299 = scalar_select %p298, %s297, 5
        %s300 = smul.addr %s299, 8
        %s301 = scalar_lea.vmem %s3, %s300
        %s302 = smul.u32 2, %s21
        %p304 = scmp.eq.s32.totalorder %s21, 0
        // Predicated region
        $region37: #{tpu_custom_call.1} parent=35 // pred_check
          %p305 = pneg %p304
        $region38: #{tpu_custom_call.1} parent=35 // pred_check_branch
          %307 = sbr.rel (%p305) target = $region40
        $region39: #{tpu_custom_call.1} parent=35 // pred_region
          %s308 = scalar_lea.smem [#allocation2], 0
          %309 = sst [smem:[%s308]] 0.0
          %310 = vst [vmem:[#allocation6] sm:$0xff] 0.0
          %311 = vst [vmem:[#allocation6 + $0x8] sm:$0xff] 0.0
          %312 = vst [vmem:[#allocation6 + $0x10] sm:$0xff] 0.0
          %313 = vst [vmem:[#allocation6 + $0x18] sm:$0xff] 0.0
          %314 = vst [vmem:[#allocation6 + $0x20] sm:$0xff] 0.0
          %315 = vst [vmem:[#allocation6 + $0x28] sm:$0xff] 0.0
          %316 = vst [vmem:[#allocation6 + $0x30] sm:$0xff] 0.0
          %317 = vst [vmem:[#allocation6 + $0x38] sm:$0xff] 0.0
          %318 = vst [vmem:[#allocation6 + $0x40] sm:$0xff] 0.0
          %319 = vst [vmem:[#allocation6 + $0x48] sm:$0xff] 0.0
          %320 = vst [vmem:[#allocation6 + $0x50] sm:$0xff] 0.0
          %321 = vst [vmem:[#allocation6 + $0x58] sm:$0xff] 0.0
          %322 = vst [vmem:[#allocation6 + $0x60] sm:$0xff] 0.0
          %323 = vst [vmem:[#allocation6 + $0x68] sm:$0xff] 0.0
          %324 = vst [vmem:[#allocation6 + $0x70] sm:$0xff] 0.0
          %325 = vst [vmem:[#allocation6 + $0x78] sm:$0xff] 0.0
          %326 = vst [vmem:[#allocation7] sm:$0x1] 0.0
        $region40: #{tpu_custom_call.1} parent=35 // pred_fallthru
          _
        %v327 = vld [vmem:[%s283] sm:$0xff]
        %v328 = vld [vmem:[%s283 + $0x8] sm:$0xff]
        %v329 = vld [vmem:[%s289] sm:$0xff]
        %v330 = vld [vmem:[%s289 + $0x8] sm:$0xff]
        %v331 = vld [vmem:[%s295] sm:$0xff]
        %v332 = vld [vmem:[%s295 + $0x8] sm:$0xff]
        %v333 = vld [vmem:[%s301] sm:$0xff]
        %v334 = vld [vmem:[%s301 + $0x8] sm:$0xff]
        %v335 = vlaneseq
        %v336 = vand.u32 %v335, 127
        %vm337 = vcmp.ge.s32.totalorder %v333, 0
        %vm338 = vcmp.ge.s32.totalorder %v334, 0
        %vm339 = vcmp.lt.s32.totalorder %v333, 16
        %vm340 = vcmp.lt.s32.totalorder %v334, 16
        %vm341 = vmand %vm337, %vm339
        %vm342 = vmand %vm338, %vm340
        %343 = vset.pattern.permute.xlu0 0
        %344 = vperm.xlu0 %343, %v333
        %v345 = vpop.permute.xlu0 %344
        %346 = vset.pattern.permute.xlu0 0
        %347 = vperm.xlu0 %346, %v334
        %v348 = vpop.permute.xlu0 %347
        %vm349 = vcmp.eq.s32.totalorder %v345, %v336
        %vm350 = vcmp.eq.s32.totalorder %v348, %v336
        %v351 = vsel %vm341, 1, 0
        %v352 = vsel %vm342, 1, 0
        %353 = vset.pattern.permute.xlu0 0
        %354 = vperm.xlu0 %353, %v351
        %v355 = vpop.permute.xlu0 %354
        %356 = vset.pattern.permute.xlu0 0
        %357 = vperm.xlu0 %356, %v352
        %v358 = vpop.permute.xlu0 %357
        %vm359 = vcmp.eq.s32.totalorder %v355, 1
        %vm360 = vcmp.eq.s32.totalorder %v358, 1
        %vm361 = vmand %vm349, %vm359
        %vm362 = vmand %vm350, %vm360
        %v363 = vsel %vm361, 1.0, 0.0
        %v364 = vsel %vm362, 1.0, 0.0
        %vm365 = vcmp.eq.s32.totalorder %v333, 16
        %vm366 = vcmp.eq.s32.totalorder %v334, 16
        %v367 = vsel %vm365, 1, 0
        %v368 = vsel %vm366, 1, 0
        %v369 = vcvt.s32.f32 %v367
        %v370 = vcvt.s32.f32 %v368
        %v371 = vadd.f32 %v327, %v331
        %v372 = vadd.f32 %v328, %v332
        %v373 = vmax.f32 %v371, 0.0
        %v374 = vmax.f32 %v372, 0.0
        %v375 = vmul.f32 %v371, %v363
        %v376 = vmul.f32 %v372, %v364
        %v377 = vsub.f32 %v373, %v375
        %v378 = vsub.f32 %v374, %v376
        %v379 = vand.u32 2147483647, %v371
        %v380 = vand.u32 2147483647, %v372
        %v381 = vsub.f32 0.0, %v379
        %v382 = vsub.f32 0.0, %v380
        %v383 = vmul.f32 %v381, 1.442695
        %v384 = vpow.pop %v383
        %v385 = vmul.f32 %v382, 1.442695
        %v386 = vpow.pop %v385
        %v387 = vadd.f32 %v384, 1.0
        %v388 = vadd.f32 %v386, 1.0
        %v389 = vlog2.pop %v387
        %v390 = vmul.f32 %v389, 0.6931472
        %v391 = vlog2.pop %v388
        %v392 = vmul.f32 %v391, 0.6931472
        %v393 = vadd.f32 %v377, %v390
        %v394 = vadd.f32 %v378, %v392
        %v395 = vadd.f32 %v393, %v394
        %396 = vadd.xlane.f32.xlu0 %v395
        %v397 = vpop.xlane.xlu0 %396
        %v398 = vrot.slane %v397, 4
        %v399 = vadd.f32 %v397, %v398
        %v400 = vrot.slane %v399, 2
        %v401 = vadd.f32 %v399, %v400
        %v402 = vrot.slane %v401, 1
        %v403 = vadd.f32 %v401, %v402
        %s404 = vtos %v403
        %v405 = vmax.f32 %v329, 0.0
        %v406 = vmax.f32 %v330, 0.0
        %v407 = vmul.f32 %v329, %v369
        %v408 = vmul.f32 %v330, %v370
        %v409 = vsub.f32 %v405, %v407
        %v410 = vsub.f32 %v406, %v408
        %v411 = vand.u32 2147483647, %v329
        %v412 = vand.u32 2147483647, %v330
        %v413 = vsub.f32 0.0, %v411
        %v414 = vsub.f32 0.0, %v412
        %v415 = vmul.f32 %v413, 1.442695
        %v416 = vpow.pop %v415
        %v417 = vmul.f32 %v414, 1.442695
        %v418 = vpow.pop %v417
        %v419 = vadd.f32 %v416, 1.0
        %v420 = vadd.f32 %v418, 1.0
        %v421 = vlog2.pop %v419
        %v422 = vmul.f32 %v421, 0.6931472
        %v423 = vlog2.pop %v420
        %v424 = vmul.f32 %v423, 0.6931472
        %v425 = vadd.f32 %v409, %v422
        %v426 = vadd.f32 %v410, %v424
        %vm427 = vcmask 7168
        %v428 = vsel %vm427, %v425, 0.0
        %v429 = vsel %vm427, %v426, 0.0
        %v430 = vadd.f32 %v428, %v429
        %431 = vadd.xlane.f32.xlu0 %v430
        %v432 = vpop.xlane.xlu0 %431
        %v433 = vrot.slane %v432, 4
        %v434 = vadd.f32 %v432, %v433
        %v435 = vrot.slane %v434, 2
        %v436 = vadd.f32 %v434, %v435
        %v437 = vrot.slane %v436, 1
        %v438 = vadd.f32 %v436, %v437
        %s439 = vtos %v438
        %s440 = sadd.f32 %s404, %s439
        %s441 = sld [smem:[#allocation2]]
        %s442 = sadd.f32 %s441, %s440
        %s443 = scalar_lea.smem [#allocation2], 0
        %444 = sst [smem:[%s443]] %s442
        %445 = vmax.xlane.f32.xlu0 %v327
        %v446 = vpop.xlane.xlu0 %445
        %447 = vmax.xlane.f32.xlu0 %v328
        %v448 = vpop.xlane.xlu0 %447
        %v449 = vsub.f32 %v327, %v446
        %v450 = vsub.f32 %v328, %v448
        %v451 = vmul.f32 %v449, 1.442695
        %v452 = vpow.pop %v451
        %v453 = vmul.f32 %v450, 1.442695
        %v454 = vpow.pop %v453
        %455 = vadd.xlane.f32.xlu0 %v452
        %v456 = vpop.xlane.xlu0 %455
        %457 = vadd.xlane.f32.xlu0 %v454
        %v458 = vpop.xlane.xlu0 %457
        %v459 = vrcp.pop %v456
        %v460 = vrcp.pop %v458
        %v461 = vmul.f32 %v452, %v459
        %v462 = vmul.f32 %v454, %v460
        %v463 = vpack.c.bf16 %v364, %v363
        %v464 = vld [vmem:[#allocation6] sm:$0xff]
        %v465 = vld [vmem:[#allocation6 + $0x8] sm:$0xff]
        %v466 = vld [vmem:[#allocation6 + $0x10] sm:$0xff]
        %v467 = vld [vmem:[#allocation6 + $0x18] sm:$0xff]
        %v468 = vld [vmem:[#allocation6 + $0x20] sm:$0xff]
        %v469 = vld [vmem:[#allocation6 + $0x28] sm:$0xff]
        %v470 = vld [vmem:[#allocation6 + $0x30] sm:$0xff]
        %v471 = vld [vmem:[#allocation6 + $0x38] sm:$0xff]
        %v472 = vld [vmem:[#allocation6 + $0x40] sm:$0xff]
        %v473 = vld [vmem:[#allocation6 + $0x48] sm:$0xff]
        %v474 = vld [vmem:[#allocation6 + $0x50] sm:$0xff]
        %v475 = vld [vmem:[#allocation6 + $0x58] sm:$0xff]
        %v476 = vld [vmem:[#allocation6 + $0x60] sm:$0xff]
        %v477 = vld [vmem:[#allocation6 + $0x68] sm:$0xff]
        %v478 = vld [vmem:[#allocation6 + $0x70] sm:$0xff]
        %v479 = vld [vmem:[#allocation6 + $0x78] sm:$0xff]
        %480 = vxpose.xlu0.c.b16.start [1/8] %v463, 128
        %481 = vxpose.xlu0.c.b16.cont [2/8] 0, 128
        %482 = vxpose.xlu0.c.b16.cont [3/8] 0, 128
        %483 = vxpose.xlu0.c.b16.cont [4/8] 0, 128
        %484 = vxpose.xlu0.c.b16.cont [5/8] 0, 128
        %485 = vxpose.xlu0.c.b16.cont [6/8] 0, 128
        %486 = vxpose.xlu0.c.b16.cont [7/8] 0, 128
        %487 = vxpose.xlu0.c.b16.end [8/8] 0, 128
        %v488 = vpop.trf.xlu0
        %v489 = vpop.trf.xlu0
        %v490 = vpop.trf.xlu0
        %v491 = vpop.trf.xlu0
        %v492 = vpop.trf.xlu0
        %v493 = vpop.trf.xlu0
        %v494 = vpop.trf.xlu0
        %v495 = vpop.trf.xlu0
        %v496 = vpack.c.bf16 %v462, %v461
        %vm497 = vcmask 130048
        %v499 = vsel %vm497, %v488, 0
        %v502 = vsel %vm497, %v489, 0
        %v505 = vsel %vm497, %v490, 0
        %v508 = vsel %vm497, %v491, 0
        %v511 = vsel %vm497, %v492, 0
        %v514 = vsel %vm497, %v493, 0
        %v517 = vsel %vm497, %v494, 0
        %v520 = vsel %vm497, %v495, 0
        %522 = vmatprep.subr.bf16.mxu0 0
        %523 = vmatpush1.bf16.msra.mxu0 0
        %524 = vmatprep.subr.bf16.mxu0 0
        %525 = vmatpush1.bf16.msra.mxu0 0
        %526 = vmatprep.subr.bf16.mxu0 0
        %527 = vmatpush1.bf16.msra.mxu0 0
        %528 = vmatprep.subr.bf16.mxu0 0
        %529 = vmatpush1.bf16.msra.mxu0 0
        %530 = vmatprep.subr.bf16.mxu0 0
        %531 = vmatpush1.bf16.msra.mxu0 0
        %532 = vmatprep.subr.bf16.mxu0 0
        %533 = vmatpush1.bf16.msra.mxu0 0
        %534 = vmatprep.subr.bf16.mxu0 0
        %535 = vmatpush1.bf16.msra.mxu0 0
        %536 = vmatprep.subr.bf16.mxu0 0
        %537 = vmatpush1.bf16.msra.mxu0 %v496
        %538 = vmatprep.subr.bf16.mxu0 0
        %539 = vmatpush2.bf16.msra.mxu0 0
        %540 = vmatprep.subr.bf16.mxu0 0
        %541 = vmatpush2.bf16.msra.mxu0 0
        %542 = vmatprep.subr.bf16.mxu0 0
        %543 = vmatpush2.bf16.msra.mxu0 0
        %544 = vmatprep.subr.bf16.mxu0 0
        %545 = vmatpush2.bf16.msra.mxu0 0
        %546 = vmatprep.subr.bf16.mxu0 0
        %547 = vmatpush2.bf16.msra.mxu0 0
        %548 = vmatprep.subr.bf16.mxu0 0
        %549 = vmatpush2.bf16.msra.mxu0 0
        %550 = vmatprep.subr.bf16.mxu0 0
        %551 = vmatpush2.bf16.msra.mxu0 0
        %552 = vmatprep.subr.bf16.mxu0 0
        %553 = vmatpush2.bf16.msra.mxu0 0
        %554 = vmatprep.mubr.bf16.mxu0 0
        %555 = vmatmul.mubr.bf16.gmra.mxu0 %v499
        %v556 = vpop.f32.mrf.mxu0
        %v557 = vadd.f32 0.0, %v556
        %v558 = vpop.f32.mrf.mxu0
        %v559 = vpop.f32.mrf.mxu0
        %v560 = vadd.f32 0.0, %v559
        %v561 = vpop.f32.mrf.mxu0
        %562 = vmatprep.mubr.bf16.mxu0 0
        %563 = vmatmul.mubr.bf16.gmra.mxu0 %v502
        %v564 = vpop.f32.mrf.mxu0
        %v565 = vadd.f32 0.0, %v564
        %v566 = vpop.f32.mrf.mxu0
        %v567 = vpop.f32.mrf.mxu0
        %v568 = vadd.f32 0.0, %v567
        %v569 = vpop.f32.mrf.mxu0
        %570 = vmatprep.mubr.bf16.mxu0 0
        %571 = vmatmul.mubr.bf16.gmra.mxu0 %v505
        %v572 = vpop.f32.mrf.mxu0
        %v573 = vadd.f32 0.0, %v572
        %v574 = vpop.f32.mrf.mxu0
        %v575 = vpop.f32.mrf.mxu0
        %v576 = vadd.f32 0.0, %v575
        %v577 = vpop.f32.mrf.mxu0
        %578 = vmatprep.mubr.bf16.mxu0 0
        %579 = vmatmul.mubr.bf16.gmra.mxu0 %v508
        %v580 = vpop.f32.mrf.mxu0
        %v581 = vadd.f32 0.0, %v580
        %v582 = vpop.f32.mrf.mxu0
        %v583 = vpop.f32.mrf.mxu0
        %v584 = vadd.f32 0.0, %v583
        %v585 = vpop.f32.mrf.mxu0
        %586 = vmatprep.mubr.bf16.mxu0 0
        %587 = vmatmul.mubr.bf16.gmra.mxu0 %v511
        %v588 = vpop.f32.mrf.mxu0
        %v589 = vadd.f32 0.0, %v588
        %v590 = vpop.f32.mrf.mxu0
        %v591 = vpop.f32.mrf.mxu0
        %v592 = vadd.f32 0.0, %v591
        %v593 = vpop.f32.mrf.mxu0
        %594 = vmatprep.mubr.bf16.mxu0 0
        %595 = vmatmul.mubr.bf16.gmra.mxu0 %v514
        %v596 = vpop.f32.mrf.mxu0
        %v597 = vadd.f32 0.0, %v596
        %v598 = vpop.f32.mrf.mxu0
        %v599 = vpop.f32.mrf.mxu0
        %v600 = vadd.f32 0.0, %v599
        %v601 = vpop.f32.mrf.mxu0
        %602 = vmatprep.mubr.bf16.mxu0 0
        %603 = vmatmul.mubr.bf16.gmra.mxu0 %v517
        %v604 = vpop.f32.mrf.mxu0
        %v605 = vadd.f32 0.0, %v604
        %v606 = vpop.f32.mrf.mxu0
        %v607 = vpop.f32.mrf.mxu0
        %v608 = vadd.f32 0.0, %v607
        %v609 = vpop.f32.mrf.mxu0
        %610 = vmatprep.mubr.bf16.mxu0 0
        %611 = vmatmul.mubr.bf16.gmra.mxu0 %v520
        %v612 = vpop.f32.mrf.mxu0
        %v613 = vadd.f32 0.0, %v612
        %v614 = vpop.f32.mrf.mxu0
        %v615 = vpop.f32.mrf.mxu0
        %v616 = vadd.f32 0.0, %v615
        %v617 = vpop.f32.mrf.mxu0
        %618 = vdwg.mxu0
        %v619 = vadd.f32 %v464, %v557
        %v620 = vadd.f32 %v465, %v560
        %v621 = vadd.f32 %v466, %v565
        %v622 = vadd.f32 %v467, %v568
        %v623 = vadd.f32 %v468, %v573
        %v624 = vadd.f32 %v469, %v576
        %v625 = vadd.f32 %v470, %v581
        %v626 = vadd.f32 %v471, %v584
        %v627 = vadd.f32 %v472, %v589
        %v628 = vadd.f32 %v473, %v592
        %v629 = vadd.f32 %v474, %v597
        %v630 = vadd.f32 %v475, %v600
        %v631 = vadd.f32 %v476, %v605
        %v632 = vadd.f32 %v477, %v608
        %v633 = vadd.f32 %v478, %v613
        %v634 = vadd.f32 %v479, %v616
        %635 = vst [vmem:[#allocation6] sm:$0xff] %v619
        %636 = vst [vmem:[#allocation6 + $0x8] sm:$0xff] %v620
        %637 = vst [vmem:[#allocation6 + $0x10] sm:$0xff] %v621
        %638 = vst [vmem:[#allocation6 + $0x18] sm:$0xff] %v622
        %639 = vst [vmem:[#allocation6 + $0x20] sm:$0xff] %v623
        %640 = vst [vmem:[#allocation6 + $0x28] sm:$0xff] %v624
        %641 = vst [vmem:[#allocation6 + $0x30] sm:$0xff] %v625
        %642 = vst [vmem:[#allocation6 + $0x38] sm:$0xff] %v626
        %643 = vst [vmem:[#allocation6 + $0x40] sm:$0xff] %v627
        %644 = vst [vmem:[#allocation6 + $0x48] sm:$0xff] %v628
        %645 = vst [vmem:[#allocation6 + $0x50] sm:$0xff] %v629
        %646 = vst [vmem:[#allocation6 + $0x58] sm:$0xff] %v630
        %647 = vst [vmem:[#allocation6 + $0x60] sm:$0xff] %v631
        %648 = vst [vmem:[#allocation6 + $0x68] sm:$0xff] %v632
        %649 = vst [vmem:[#allocation6 + $0x70] sm:$0xff] %v633
        %650 = vst [vmem:[#allocation6 + $0x78] sm:$0xff] %v634
        %v651 = vld [vmem:[#allocation7] sm:$0x1]
        %v652 = vadd.f32 %v363, %v364
        %v653 = vrot.slane %v652, 4
        %v654 = vadd.f32 %v652, %v653
        %v655 = vrot.slane %v654, 2
        %v656 = vadd.f32 %v654, %v655
        %v657 = vrot.slane %v656, 1
        %v658 = vadd.f32 %v656, %v657
        %v659 = vadd.f32 %v651, %v658
        %660 = vst [vmem:[#allocation7] sm:$0x1] %v659
        %p661 = scmp.eq.s32.totalorder %s21, 2
        // Predicated region
        $region41: #{tpu_custom_call.1} parent=35 // pred_check
          %p662 = pneg %p661
        $region42: #{tpu_custom_call.1} parent=35 // pred_check_branch
          %664 = sbr.rel (%p662) target = $region44
        $region43: #{tpu_custom_call.1} parent=35 // pred_region
          %s665 = sld [smem:[#allocation2]]
          %s666 = smul.f32 %s665, 0.025
          %s667 = scalar_lea.smem [#allocation3], 0
          %668 = sst [smem:[%s667]] %s666
        $region44: #{tpu_custom_call.1} parent=35 // pred_fallthru
          _
        // Predicated region
        $region45: #{tpu_custom_call.1} parent=35 // pred_check
          %p669 = pneg %p138
        $region46: #{tpu_custom_call.1} parent=35 // pred_check_branch
          %671 = sbr.rel (%p669) target = $region48
        $region47: #{tpu_custom_call.1} parent=35 // pred_region
          %s673 = ssub.s32 16, 16
          %674 = vsyncadd [#allocation5], %s673
          %677 = dma.smem_to_hbm [#allocation3], 16, %s4, [#allocation5]
        $region48: #{tpu_custom_call.1} parent=35 // pred_fallthru
          _
        // Predicated region
        $region49: #{tpu_custom_call.1} parent=35 // pred_check
          %p678 = pneg %p159
        $region50: #{tpu_custom_call.1} parent=35 // pred_check_branch
          %680 = sbr.rel (%p678) target = $region52
        $region51: #{tpu_custom_call.1} parent=35 // pred_region
          %s682 = ssub.s32 2048, 2048
          %683 = vsyncadd [#allocation4], %s682
          %s684 = sshll.u32 [#allocation6], 4
          %s685 = int_to_ptr.vmem [resolvable:$true] %s684
          %690 = dma.vmem_to_hbm [thread:$0]  %s685, 2048, %s5, [#allocation4], 128, 128, 8
        $region52: #{tpu_custom_call.1} parent=35 // pred_fallthru
          _
        // Predicated region
        $region53: #{tpu_custom_call.1} parent=35 // pred_check
          %p691 = pneg %p180
        $region54: #{tpu_custom_call.1} parent=35 // pred_check_branch
          %693 = sbr.rel (%p691) target = $region56
        $region55: #{tpu_custom_call.1} parent=35 // pred_region
          %s695 = ssub.s32 16, 16
          %696 = vsyncadd [#allocation8], %s695
          %s698 = sshll.u32 [#allocation7], 4
          %s699 = int_to_ptr.vmem [resolvable:$true] %s698
          %701 = dma.vmem_to_hbm [thread:$0]  %s699, 16, %s6, [#allocation8]
        $region56: #{tpu_custom_call.1} parent=35 // pred_fallthru
          _
        // Predicated region
        $region57: #{tpu_custom_call.1} parent=35 // pred_check
          %p702 = pneg %p138
        $region58: #{tpu_custom_call.1} parent=35 // pred_check_branch
          %704 = sbr.rel (%p702) target = $region60
        $region59: #{tpu_custom_call.1} parent=35 // pred_region
          %705 = dma.done [#allocation5], 16
        $region60: #{tpu_custom_call.1} parent=35 // pred_fallthru
          _
        // Predicated region
        $region61: #{tpu_custom_call.1} parent=35 // pred_check
          %p706 = pneg %p159
        $region62: #{tpu_custom_call.1} parent=35 // pred_check_branch
          %708 = sbr.rel (%p706) target = $region64
        $region63: #{tpu_custom_call.1} parent=35 // pred_region
          %709 = dma.done [#allocation4], 2048
        $region64: #{tpu_custom_call.1} parent=35 // pred_fallthru
          _
        // Predicated region
        $region65: #{tpu_custom_call.1} parent=35 // pred_check
          %p710 = pneg %p180
        $region66: #{tpu_custom_call.1} parent=35 // pred_check_branch
          %712 = sbr.rel (%p710) target = $region68
        $region67: #{tpu_custom_call.1} parent=35 // pred_region
          %713 = dma.done [#allocation8], 16
        $region68: #{tpu_custom_call.1} parent=35 // pred_fallthru
          _
        %714 = sfence
      $region36: #{tpu_custom_call.1} parent=5 // pred_fallthru
        _
      %p715 = scmp.le.s32.totalorder 2, %s16
      // Predicated region
      $region69: #{tpu_custom_call.1} parent=5 // pred_check
        %p716 = pneg %p715
      $region70: #{tpu_custom_call.1} parent=5 // pred_check_branch
        %718 = sbr.rel (%p716) target = $region72
      $region71: #{tpu_custom_call.1} parent=5 // pred_region
        %s719 = ssub.s32 %s16, 2
      $region72: #{tpu_custom_call.1} parent=5 // pred_fallthru
        _
    $region6: #{tpu_custom_call.1} parent=1 // loop_footer
      %s20 = sadd.s32 1, %s16
    $region7: #{tpu_custom_call.1} parent=1 // loop_footer_branch
      %15 = sbr.rel target = $region3
    $region8: #{tpu_custom_call.1} parent=1 // loop_exit
      _
    %720 = vsyncpa [#allocation4], 1
    %s721 = scalar_lea.sflag [#allocation4], 1
    %722 = vsyncpa %s721, 1
    %723 = vsyncpa [#allocation8], 1
    %724 = vsyncpa [#allocation5], 1
    %s725 = scalar_lea.sflag [#allocation5], 1
    %726 = vsyncpa %s725, 1

</llo_original>
